<compile_context>
chip_gen: v5e
topology: v5e:2x2
jax: 0.10.0
libtpu: 0.0.40
codegen_flags: <defaults>
</compile_context>

<pallas_src>
import jax
import jax.numpy as jnp
from jax.experimental import pallas as pl
from jax.experimental.pallas import tpu as pltpu


def _round_up(x, m):
    return (x + m - 1) // m * m


def _cdiv(a, b):
    return -(-a // b)


def mlp_residual_kernel(obs_ref, act_ref,
                        w1_ref, b1_ref,
                        w2_ref, b2_ref,
                        w3_ref, b3_ref,
                        wrh_ref, wra_ref, br_ref,
                        out_ref):
    # Base MLP: three MXU matmuls + tanh (EUP). All operand lane dims are 128-padded.
    # Matmul precision follows the weight dtype (f32 default, bf16 if prepared that way);
    # accumulation and tanh stay f32.
    w_dt = w1_ref.dtype
    x = obs_ref[...].astype(w_dt)
    h = jnp.tanh(jnp.dot(x, w1_ref[...],
                         preferred_element_type=jnp.float32) + b1_ref[...])
    h = jnp.tanh(jnp.dot(h.astype(w_dt), w2_ref[...],
                         preferred_element_type=jnp.float32) + b2_ref[...])
    h = jnp.tanh(jnp.dot(h.astype(w_dt), w3_ref[...],
                         preferred_element_type=jnp.float32) + b3_ref[...])

    # Residual head: out[b] = sum_l h[b,l]*wrh[l] + act[b]*wra + br, expressed as
    # wrh @ h^T (contract last dims of both operands, the q·k^T pattern) so the result is
    # produced lane-dense [8, TILE_B] directly by the MXU (no materialized transpose of h).
    head = jax.lax.dot_general(
        wrh_ref[...], h.astype(wrh_ref.dtype), (((1,), (1,)), ((), ())),
        preferred_element_type=jnp.float32)          # [8, TILE_B]; only row 0 is meaningful
    out_ref[...] = head[0:1, :] + act_ref[...] * wra_ref[0, 0] + br_ref[0, 0]


def prepare_params(params, obs_dim, compute_dtype=jnp.float32):
    """One-time padding/precision prep, hoisted out of the per-call path."""
    w1, b1, w2, b2, w3, b3, wr, br = params
    hidden = w1.shape[1]
    latent = w3.shape[1]
    HID = _round_up(hidden, 128)
    LAT = _round_up(latent, 128)

    cdt = compute_dtype
    f32 = jnp.float32
    # Zero-pad hidden/latent dims to 128 lanes (padded activations stay exactly 0).
    w1p = jnp.zeros((obs_dim, HID), cdt).at[:, :hidden].set(w1.astype(cdt))
    b1p = jnp.zeros((1, HID), f32).at[0, :hidden].set(b1.astype(f32))
    w2p = jnp.zeros((HID, HID), cdt).at[:hidden, :hidden].set(w2.astype(cdt))
    b2p = jnp.zeros((1, HID), f32).at[0, :hidden].set(b2.astype(f32))
    w3p = jnp.zeros((HID, LAT), cdt).at[:hidden, :latent].set(w3.astype(cdt))
    b3p = jnp.zeros((1, LAT), f32).at[0, :latent].set(b3.astype(f32))
    # Head weight on the hidden part: 8 sublanes for the MXU (row 0 real, rest zero).
    wrhp = jnp.zeros((8, LAT), cdt).at[0, :latent].set(wr[:latent, 0].astype(cdt))
    wra = wr[latent:, :].reshape(1, 1).astype(f32)      # scalar weight on the action feature
    brp = br.reshape(1, 1).astype(f32)                  # scalar bias
    return (w1p, b1p, w2p, b2p, w3p, b3p, wrhp, wra, brp), (HID, LAT)


def _vmem_bytes_estimate(tb, obs_dim, HID, LAT, w_itemsize):
    """Conservative per-call VMEM footprint with single-buffered weights."""
    obs_lanes = _round_up(obs_dim, 128)                  # obs tile is lane-padded in VMEM
    weights = (obs_dim * HID + HID * HID + HID * LAT + 8 * LAT) * w_itemsize \
        + 3 * max(HID, LAT) * 4                          # biases
    streams = 2 * tb * obs_lanes * 4                     # obs, double-buffered
    streams += 2 * 2 * 8 * tb * 4                        # action row + output row (sublane-padded)
    live = 3 * tb * max(HID, LAT) * 4                    # live activations (conservative)
    return weights + streams + live


def _choose_batch_tile(B, obs_dim, HID, LAT, w_itemsize, tile_b, vmem_budget):
    B_up = _round_up(B, 128)
    n = _cdiv(B_up, min(tile_b, B_up))
    if B_up >= 256:
        n = max(n, 2)            # v7x: >= 2 grid steps so both TensorCores get work
    tb = _round_up(_cdiv(B_up, n), 128)
    # Respect the smallest default scoped-VMEM limit (16 MiB on v5e) on all generations.
    while tb > 128 and _vmem_bytes_estimate(tb, obs_dim, HID, LAT, w_itemsize) > vmem_budget:
        tb = max(128, _round_up(tb // 2, 128))
    B_pad = _round_up(B, tb)
    return tb, B_pad, B_pad // tb


def mlp_residual_forward(obs, actions, padded_params, *, tile_b=1024,
                         vmem_budget_bytes=16 * 1024 * 1024):
    """obs: [B, obs_dim] f32, actions: [B, 1] f32 -> [B, 1] f32.

    `padded_params` must come from prepare_params() (padding done once, not per call).
    """
    B, obs_dim = obs.shape
    (w1p, b1p, w2p, b2p, w3p, b3p, wrhp, wra, brp) = padded_params
    HID = w1p.shape[1]
    LAT = w3p.shape[1]
    w_itemsize = jnp.dtype(w1p.dtype).itemsize

    tb, B_pad, n_tiles = _choose_batch_tile(B, obs_dim, HID, LAT, w_itemsize,
                                            tile_b, vmem_budget_bytes)

    f32 = jnp.float32
    obs = obs.astype(f32)
    actions = actions.astype(f32)
    if B_pad != B:
        # Ragged batch: pad up to a full tile (extra rows compute garbage that is sliced off).
        obs_p = jnp.zeros((B_pad, obs_dim), f32).at[:B, :].set(obs)
        act_row = jnp.zeros((1, B_pad), f32).at[0, :B].set(actions[:, 0])
    else:
        # Tile-aligned batch: no extra HBM padding pass over obs.
        obs_p = obs
        act_row = actions.reshape(1, B_pad)              # (B,1)->(1,B): same row-major order

    flops = 2 * B_pad * (obs_dim * HID + HID * HID + HID * LAT + LAT)
    cost = pl.CostEstimate(
        flops=flops,
        transcendentals=B_pad * (2 * HID + LAT),
        bytes_accessed=(4 * B_pad * (obs_dim + 2)
                        + w_itemsize * (obs_dim * HID + HID * HID + HID * LAT + 8 * LAT)
                        + 4 * (2 * HID + LAT)),
    )

    smem = pl.BlockSpec(memory_space=pltpu.MemorySpace.SMEM)

    def build_call(single_buffer_weights):
        def resident(shape):      # weights/biases VMEM-resident via constant index_map
            if single_buffer_weights:
                return pl.BlockSpec(shape, lambda i: (0, 0), pipeline_mode=pl.Buffered(1))
            return pl.BlockSpec(shape, lambda i: (0, 0))

        return pl.pallas_call(
            mlp_residual_kernel,
            out_shape=jax.ShapeDtypeStruct((1, B_pad), f32),
            grid=(n_tiles,),
            in_specs=[
                pl.BlockSpec((tb, obs_dim), lambda i: (i, 0)),   # obs: streamed batch tile
                pl.BlockSpec((1, tb), lambda i: (0, i)),         # actions: lane-dense row tile
                resident((obs_dim, HID)),                        # w1
                resident((1, HID)),                              # b1
                resident((HID, HID)),                            # w2
                resident((1, HID)),                              # b2
                resident((HID, LAT)),                            # w3
                resident((1, LAT)),                              # b3
                resident((8, LAT)),                              # wr (hidden part)
                smem,                                            # wr action scalar
                smem,                                            # br scalar
            ],
            out_specs=pl.BlockSpec((1, tb), lambda i: (0, i)),   # lane-dense output row
            compiler_params=pltpu.CompilerParams(
                dimension_semantics=("parallel",)),
            cost_estimate=cost,
        )

    args = (obs_p, act_row, w1p, b1p, w2p, b2p, w3p, b3p, wrhp, wra, brp)
    try:
        # Single-buffered resident weights (halves resident-weight VMEM; matters at hidden>=512).
        out_row = build_call(True)(*args)
    except Exception:
        # Fallback if this jax/libtpu combo rejects pipeline_mode/Buffered(1): default
        # double-buffered resident weights (identical numerics, slightly more VMEM).
        out_row = build_call(False)(*args)

    return out_row[0, :B].reshape(B, 1)


def init_params(key, obs_dim, hidden_size, latent_size):
    ks = jax.random.split(key, 8)

    def lin(kw, kb, fan_in, fan_out):
        bound = 1.0 / jnp.sqrt(fan_in)
        w = jax.random.uniform(kw, (fan_in, fan_out), jnp.float32, -bound, bound)
        b = jax.random.uniform(kb, (fan_out,), jnp.float32, -bound, bound)
        return w, b

    w1, b1 = lin(ks[0], ks[1], obs_dim, hidden_size)
    w2, b2 = lin(ks[2], ks[3], hidden_size, hidden_size)
    w3, b3 = lin(ks[4], ks[5], hidden_size, latent_size)
    wr, br = lin(ks[6], ks[7], latent_size + 1, 1)
    return (w1, b1, w2, b2, w3, b3, wr, br)


def reference_forward(obs, actions, params):
    (w1, b1, w2, b2, w3, b3, wr, br) = params
    h = jnp.tanh(obs @ w1 + b1)
    h = jnp.tanh(h @ w2 + b2)
    h = jnp.tanh(h @ w3 + b3)
    feat = jnp.concatenate([h, actions], axis=-1)
    return feat @ wr + br


if __name__ == "__main__":
    key = jax.random.PRNGKey(0)
    k_obs, k_act, k_par = jax.random.split(key, 3)

    B, OBS_DIM, HIDDEN, LATENT = 8, 16, 32, 32
    obs = jax.random.normal(k_obs, (B, OBS_DIM), jnp.float32)
    actions = jax.random.normal(k_act, (B, 1), jnp.float32)
    params = init_params(k_par, OBS_DIM, HIDDEN, LATENT)

    # One-time padding prep (hoisted out of the per-call path per performance review).
    padded_params, _ = prepare_params(params, OBS_DIM)

    out = mlp_residual_forward(obs, actions, padded_params)
    out = jax.block_until_ready(out)

    ref = reference_forward(obs, actions, params)
    assert out.shape == (B, 1)
    assert jnp.allclose(out, ref, atol=1e-5, rtol=1e-5), (out, ref)
    print("KERNEL_OK")
</pallas_src>

<mosaic_0001>
module attributes {stable_mosaic.version = 11 : i64} {
  func.func @mlp_residual_kernel(%arg0: i32, %arg1: memref<128x16xf32, #tpu.memory_space<vmem>>, %arg2: memref<1x128xf32, #tpu.memory_space<vmem>>, %arg3: memref<16x128xf32, #tpu.memory_space<vmem>>, %arg4: memref<1x128xf32, #tpu.memory_space<vmem>>, %arg5: memref<128x128xf32, #tpu.memory_space<vmem>>, %arg6: memref<1x128xf32, #tpu.memory_space<vmem>>, %arg7: memref<128x128xf32, #tpu.memory_space<vmem>>, %arg8: memref<1x128xf32, #tpu.memory_space<vmem>>, %arg9: memref<8x128xf32, #tpu.memory_space<vmem>>, %arg10: memref<1x1xf32, #tpu.memory_space<smem>>, %arg11: memref<1x1xf32, #tpu.memory_space<smem>>, %arg12: memref<1x128xf32, #tpu.memory_space<vmem>>) attributes {dimension_semantics = [#tpu.dimension_semantics<parallel>], iteration_bounds = array<i64: 1>, scalar_prefetch = 0 : i64, scratch_operands = 0 : i64, tpu.core_type = #tpu.core_type<tc>, window_params = [{transform_indices = @transform_0, window_bounds = array<i64: 128, 16>}, {transform_indices = @transform_1, window_bounds = array<i64: 1, 128>}, {pipeline_mode = #tpu.pipeline_mode<synchronous>, transform_indices = @transform_2, window_bounds = array<i64: 16, 128>}, {pipeline_mode = #tpu.pipeline_mode<synchronous>, transform_indices = @transform_3, window_bounds = array<i64: 1, 128>}, {pipeline_mode = #tpu.pipeline_mode<synchronous>, transform_indices = @transform_4, window_bounds = array<i64: 128, 128>}, {pipeline_mode = #tpu.pipeline_mode<synchronous>, transform_indices = @transform_5, window_bounds = array<i64: 1, 128>}, {pipeline_mode = #tpu.pipeline_mode<synchronous>, transform_indices = @transform_6, window_bounds = array<i64: 128, 128>}, {pipeline_mode = #tpu.pipeline_mode<synchronous>, transform_indices = @transform_7, window_bounds = array<i64: 1, 128>}, {pipeline_mode = #tpu.pipeline_mode<synchronous>, transform_indices = @transform_8, window_bounds = array<i64: 8, 128>}, {transform_indices = @transform_9, window_bounds = array<i64: 1, 1>}, {transform_indices = @transform_10, window_bounds = array<i64: 1, 1>}, {transform_indices = @transform_11, window_bounds = array<i64: 1, 128>}]} {
    %c0 = arith.constant 0 : index
    %c0_0 = arith.constant 0 : index
    %0 = vector.load %arg1[%c0, %c0_0] : memref<128x16xf32, #tpu.memory_space<vmem>>, vector<128x16xf32>
    %c0_1 = arith.constant 0 : index
    %c0_2 = arith.constant 0 : index
    %1 = vector.load %arg3[%c0_1, %c0_2] : memref<16x128xf32, #tpu.memory_space<vmem>>, vector<16x128xf32>
    %cst = arith.constant dense<0.000000e+00> : vector<128x128xf32>
    %2 = tpu.matmul %0, %1, %cst {dimension_numbers = #tpu.dot_dimension_numbers<[1], [0], [0], [1], [0, 0, 1, 1], [], []>} : vector<128x16xf32>, vector<16x128xf32>, vector<128x128xf32> -> vector<128x128xf32>
    %c0_3 = arith.constant 0 : index
    %c0_4 = arith.constant 0 : index
    %3 = vector.load %arg4[%c0_3, %c0_4] : memref<1x128xf32, #tpu.memory_space<vmem>>, vector<1x128xf32>
    %4 = vector.broadcast %3 : vector<1x128xf32> to vector<128x128xf32>
    %5 = arith.addf %2, %4 : vector<128x128xf32>
    %6 = math.tanh %5 : vector<128x128xf32>
    %c0_5 = arith.constant 0 : index
    %c0_6 = arith.constant 0 : index
    %7 = vector.load %arg5[%c0_5, %c0_6] : memref<128x128xf32, #tpu.memory_space<vmem>>, vector<128x128xf32>
    %cst_7 = arith.constant dense<0.000000e+00> : vector<128x128xf32>
    %8 = tpu.matmul %6, %7, %cst_7 {dimension_numbers = #tpu.dot_dimension_numbers<[1], [0], [0], [1], [0, 0, 1, 1], [], []>} : vector<128x128xf32>, vector<128x128xf32>, vector<128x128xf32> -> vector<128x128xf32>
    %c0_8 = arith.constant 0 : index
    %c0_9 = arith.constant 0 : index
    %9 = vector.load %arg6[%c0_8, %c0_9] : memref<1x128xf32, #tpu.memory_space<vmem>>, vector<1x128xf32>
    %10 = vector.broadcast %9 : vector<1x128xf32> to vector<128x128xf32>
    %11 = arith.addf %8, %10 : vector<128x128xf32>
    %12 = math.tanh %11 : vector<128x128xf32>
    %c0_10 = arith.constant 0 : index
    %c0_11 = arith.constant 0 : index
    %13 = vector.load %arg7[%c0_10, %c0_11] : memref<128x128xf32, #tpu.memory_space<vmem>>, vector<128x128xf32>
    %cst_12 = arith.constant dense<0.000000e+00> : vector<128x128xf32>
    %14 = tpu.matmul %12, %13, %cst_12 {dimension_numbers = #tpu.dot_dimension_numbers<[1], [0], [0], [1], [0, 0, 1, 1], [], []>} : vector<128x128xf32>, vector<128x128xf32>, vector<128x128xf32> -> vector<128x128xf32>
    %c0_13 = arith.constant 0 : index
    %c0_14 = arith.constant 0 : index
    %15 = vector.load %arg8[%c0_13, %c0_14] : memref<1x128xf32, #tpu.memory_space<vmem>>, vector<1x128xf32>
    %16 = vector.broadcast %15 : vector<1x128xf32> to vector<128x128xf32>
    %17 = arith.addf %14, %16 : vector<128x128xf32>
    %18 = math.tanh %17 : vector<128x128xf32>
    %c0_15 = arith.constant 0 : index
    %c0_16 = arith.constant 0 : index
    %19 = vector.load %arg9[%c0_15, %c0_16] : memref<8x128xf32, #tpu.memory_space<vmem>>, vector<8x128xf32>
    %cst_17 = arith.constant dense<0.000000e+00> : vector<8x128xf32>
    %20 = tpu.matmul %19, %18, %cst_17 {dimension_numbers = #tpu.dot_dimension_numbers<[1], [1], [0], [0], [0, 0, 1, 0], [], []>} : vector<8x128xf32>, vector<128x128xf32>, vector<8x128xf32> -> vector<8x128xf32>
    %21 = vector.extract_strided_slice %20 {offsets = [0, 0], sizes = [1, 128], strides = [1, 1]} : vector<8x128xf32> to vector<1x128xf32>
    %c0_18 = arith.constant 0 : index
    %c0_19 = arith.constant 0 : index
    %22 = vector.load %arg2[%c0_18, %c0_19] : memref<1x128xf32, #tpu.memory_space<vmem>>, vector<1x128xf32>
    %c0_20 = arith.constant 0 : index
    %c0_21 = arith.constant 0 : index
    %23 = memref.load %arg10[%c0_20, %c0_21] : memref<1x1xf32, #tpu.memory_space<smem>>
    %24 = vector.broadcast %23 : f32 to vector<1x128xf32>
    %25 = arith.mulf %22, %24 : vector<1x128xf32>
    %26 = arith.addf %21, %25 : vector<1x128xf32>
    %c0_22 = arith.constant 0 : index
    %c0_23 = arith.constant 0 : index
    %27 = memref.load %arg11[%c0_22, %c0_23] : memref<1x1xf32, #tpu.memory_space<smem>>
    %28 = vector.broadcast %27 : f32 to vector<1x128xf32>
    %29 = arith.addf %26, %28 : vector<1x128xf32>
    %c0_24 = arith.constant 0 : index
    %c0_25 = arith.constant 0 : index
    %30 = vector.load %arg12[%c0_24, %c0_25] : memref<1x128xf32, #tpu.memory_space<vmem>>, vector<1x128xf32>
    tpu.vector_store %arg12[%c0_24, %c0_25], %29 {strides = array<i32>} : memref<1x128xf32, #tpu.memory_space<vmem>>, vector<1x128xf32>,
    return
  }
  func.func @transform_0(%arg0: i32) -> (i32, i32) {
    %c0_i32 = arith.constant 0 : i32
    %c0_i32_0 = arith.constant 0 : i32
    return %arg0, %c0_i32 : i32, i32
  }
  func.func @transform_1(%arg0: i32) -> (i32, i32) {
    %c0_i32 = arith.constant 0 : i32
    %c0_i32_0 = arith.constant 0 : i32
    return %c0_i32, %arg0 : i32, i32
  }
  func.func @transform_2(%arg0: i32) -> (i32, i32) {
    %c0_i32 = arith.constant 0 : i32
    %c0_i32_0 = arith.constant 0 : i32
    %c0_i32_1 = arith.constant 0 : i32
    return %c0_i32, %c0_i32_0 : i32, i32
  }
  func.func @transform_3(%arg0: i32) -> (i32, i32) {
    %c0_i32 = arith.constant 0 : i32
    %c0_i32_0 = arith.constant 0 : i32
    %c0_i32_1 = arith.constant 0 : i32
    return %c0_i32, %c0_i32_0 : i32, i32
  }
  func.func @transform_4(%arg0: i32) -> (i32, i32) {
    %c0_i32 = arith.constant 0 : i32
    %c0_i32_0 = arith.constant 0 : i32
    %c0_i32_1 = arith.constant 0 : i32
    return %c0_i32, %c0_i32_0 : i32, i32
  }
  func.func @transform_5(%arg0: i32) -> (i32, i32) {
    %c0_i32 = arith.constant 0 : i32
    %c0_i32_0 = arith.constant 0 : i32
    %c0_i32_1 = arith.constant 0 : i32
    return %c0_i32, %c0_i32_0 : i32, i32
  }
  func.func @transform_6(%arg0: i32) -> (i32, i32) {
    %c0_i32 = arith.constant 0 : i32
    %c0_i32_0 = arith.constant 0 : i32
    %c0_i32_1 = arith.constant 0 : i32
    return %c0_i32, %c0_i32_0 : i32, i32
  }
  func.func @transform_7(%arg0: i32) -> (i32, i32) {
    %c0_i32 = arith.constant 0 : i32
    %c0_i32_0 = arith.constant 0 : i32
    %c0_i32_1 = arith.constant 0 : i32
    return %c0_i32, %c0_i32_0 : i32, i32
  }
  func.func @transform_8(%arg0: i32) -> (i32, i32) {
    %c0_i32 = arith.constant 0 : i32
    %c0_i32_0 = arith.constant 0 : i32
    %c0_i32_1 = arith.constant 0 : i32
    return %c0_i32, %c0_i32_0 : i32, i32
  }
  func.func @transform_9(%arg0: i32) -> (i32, i32) {
    %c0_i32 = arith.constant 0 : i32
    %c0_i32_0 = arith.constant 0 : i32
    %c0_i32_1 = arith.constant 0 : i32
    return %c0_i32, %c0_i32_0 : i32, i32
  }
  func.func @transform_10(%arg0: i32) -> (i32, i32) {
    %c0_i32 = arith.constant 0 : i32
    %c0_i32_0 = arith.constant 0 : i32
    %c0_i32_1 = arith.constant 0 : i32
    return %c0_i32, %c0_i32_0 : i32, i32
  }
  func.func @transform_11(%arg0: i32) -> (i32, i32) {
    %c0_i32 = arith.constant 0 : i32
    %c0_i32_0 = arith.constant 0 : i32
    return %c0_i32, %arg0 : i32, i32
  }
}

module attributes {stable_mosaic.version = 11 : i64} {
  func.func @mlp_residual_kernel(%arg0: i32, %arg1: memref<128x16xf32, #tpu.memory_space<vmem>>, %arg2: memref<1x128xf32, #tpu.memory_space<vmem>>, %arg3: memref<16x128xf32, #tpu.memory_space<vmem>>, %arg4: memref<1x128xf32, #tpu.memory_space<vmem>>, %arg5: memref<128x128xf32, #tpu.memory_space<vmem>>, %arg6: memref<1x128xf32, #tpu.memory_space<vmem>>, %arg7: memref<128x128xf32, #tpu.memory_space<vmem>>, %arg8: memref<1x128xf32, #tpu.memory_space<vmem>>, %arg9: memref<8x128xf32, #tpu.memory_space<vmem>>, %arg10: memref<1x1xf32, #tpu.memory_space<smem>>, %arg11: memref<1x1xf32, #tpu.memory_space<smem>>, %arg12: memref<1x128xf32, #tpu.memory_space<vmem>>) attributes {dimension_semantics = [#tpu.dimension_semantics<parallel>], iteration_bounds = array<i64: 1>, scalar_prefetch = 0 : i64, scratch_operands = 0 : i64, tpu.core_type = #tpu.core_type<tc>, window_params = [{transform_indices = @transform_0, window_bounds = array<i64: 128, 16>}, {transform_indices = @transform_1, window_bounds = array<i64: 1, 128>}, {pipeline_mode = #tpu.pipeline_mode<synchronous>, transform_indices = @transform_2, window_bounds = array<i64: 16, 128>}, {pipeline_mode = #tpu.pipeline_mode<synchronous>, transform_indices = @transform_3, window_bounds = array<i64: 1, 128>}, {pipeline_mode = #tpu.pipeline_mode<synchronous>, transform_indices = @transform_4, window_bounds = array<i64: 128, 128>}, {pipeline_mode = #tpu.pipeline_mode<synchronous>, transform_indices = @transform_5, window_bounds = array<i64: 1, 128>}, {pipeline_mode = #tpu.pipeline_mode<synchronous>, transform_indices = @transform_6, window_bounds = array<i64: 128, 128>}, {pipeline_mode = #tpu.pipeline_mode<synchronous>, transform_indices = @transform_7, window_bounds = array<i64: 1, 128>}, {pipeline_mode = #tpu.pipeline_mode<synchronous>, transform_indices = @transform_8, window_bounds = array<i64: 8, 128>}, {transform_indices = @transform_9, window_bounds = array<i64: 1, 1>}, {transform_indices = @transform_10, window_bounds = array<i64: 1, 1>}, {transform_indices = @transform_11, window_bounds = array<i64: 1, 128>}]} {
    %c0 = arith.constant 0 : index
    %c0_0 = arith.constant 0 : index
    %0 = vector.load %arg1[%c0, %c0_0] : memref<128x16xf32, #tpu.memory_space<vmem>>, vector<128x16xf32>
    %c0_1 = arith.constant 0 : index
    %c0_2 = arith.constant 0 : index
    %1 = vector.load %arg3[%c0_1, %c0_2] : memref<16x128xf32, #tpu.memory_space<vmem>>, vector<16x128xf32>
    %cst = arith.constant dense<0.000000e+00> : vector<128x128xf32>
    %2 = tpu.matmul %0, %1, %cst {dimension_numbers = #tpu.dot_dimension_numbers<[1], [0], [0], [1], [0, 0, 1, 1], [], []>} : vector<128x16xf32>, vector<16x128xf32>, vector<128x128xf32> -> vector<128x128xf32>
    %c0_3 = arith.constant 0 : index
    %c0_4 = arith.constant 0 : index
    %3 = vector.load %arg4[%c0_3, %c0_4] : memref<1x128xf32, #tpu.memory_space<vmem>>, vector<1x128xf32>
    %4 = vector.broadcast %3 : vector<1x128xf32> to vector<128x128xf32>
    %5 = arith.addf %2, %4 : vector<128x128xf32>
    %6 = math.tanh %5 : vector<128x128xf32>
    %c0_5 = arith.constant 0 : index
    %c0_6 = arith.constant 0 : index
    %7 = vector.load %arg5[%c0_5, %c0_6] : memref<128x128xf32, #tpu.memory_space<vmem>>, vector<128x128xf32>
    %cst_7 = arith.constant dense<0.000000e+00> : vector<128x128xf32>
    %8 = tpu.matmul %6, %7, %cst_7 {dimension_numbers = #tpu.dot_dimension_numbers<[1], [0], [0], [1], [0, 0, 1, 1], [], []>} : vector<128x128xf32>, vector<128x128xf32>, vector<128x128xf32> -> vector<128x128xf32>
    %c0_8 = arith.constant 0 : index
    %c0_9 = arith.constant 0 : index
    %9 = vector.load %arg6[%c0_8, %c0_9] : memref<1x128xf32, #tpu.memory_space<vmem>>, vector<1x128xf32>
    %10 = vector.broadcast %9 : vector<1x128xf32> to vector<128x128xf32>
    %11 = arith.addf %8, %10 : vector<128x128xf32>
    %12 = math.tanh %11 : vector<128x128xf32>
    %c0_10 = arith.constant 0 : index
    %c0_11 = arith.constant 0 : index
    %13 = vector.load %arg7[%c0_10, %c0_11] : memref<128x128xf32, #tpu.memory_space<vmem>>, vector<128x128xf32>
    %cst_12 = arith.constant dense<0.000000e+00> : vector<128x128xf32>
    %14 = tpu.matmul %12, %13, %cst_12 {dimension_numbers = #tpu.dot_dimension_numbers<[1], [0], [0], [1], [0, 0, 1, 1], [], []>} : vector<128x128xf32>, vector<128x128xf32>, vector<128x128xf32> -> vector<128x128xf32>
    %c0_13 = arith.constant 0 : index
    %c0_14 = arith.constant 0 : index
    %15 = vector.load %arg8[%c0_13, %c0_14] : memref<1x128xf32, #tpu.memory_space<vmem>>, vector<1x128xf32>
    %16 = vector.broadcast %15 : vector<1x128xf32> to vector<128x128xf32>
    %17 = arith.addf %14, %16 : vector<128x128xf32>
    %18 = math.tanh %17 : vector<128x128xf32>
    %c0_15 = arith.constant 0 : index
    %c0_16 = arith.constant 0 : index
    %19 = vector.load %arg9[%c0_15, %c0_16] : memref<8x128xf32, #tpu.memory_space<vmem>>, vector<8x128xf32>
    %cst_17 = arith.constant dense<0.000000e+00> : vector<8x128xf32>
    %20 = tpu.matmul %19, %18, %cst_17 {dimension_numbers = #tpu.dot_dimension_numbers<[1], [1], [0], [0], [0, 0, 1, 0], [], []>} : vector<8x128xf32>, vector<128x128xf32>, vector<8x128xf32> -> vector<8x128xf32>
    %21 = vector.extract_strided_slice %20 {offsets = [0, 0], sizes = [1, 128], strides = [1, 1]} : vector<8x128xf32> to vector<1x128xf32>
    %c0_18 = arith.constant 0 : index
    %c0_19 = arith.constant 0 : index
    %22 = vector.load %arg2[%c0_18, %c0_19] : memref<1x128xf32, #tpu.memory_space<vmem>>, vector<1x128xf32>
    %c0_20 = arith.constant 0 : index
    %c0_21 = arith.constant 0 : index
    %23 = memref.load %arg10[%c0_20, %c0_21] : memref<1x1xf32, #tpu.memory_space<smem>>
    %24 = vector.broadcast %23 : f32 to vector<1x128xf32>
    %25 = arith.mulf %22, %24 : vector<1x128xf32>
    %26 = arith.addf %21, %25 : vector<1x128xf32>
    %c0_22 = arith.constant 0 : index
    %c0_23 = arith.constant 0 : index
    %27 = memref.load %arg11[%c0_22, %c0_23] : memref<1x1xf32, #tpu.memory_space<smem>>
    %28 = vector.broadcast %27 : f32 to vector<1x128xf32>
    %29 = arith.addf %26, %28 : vector<1x128xf32>
    %c0_24 = arith.constant 0 : index
    %c0_25 = arith.constant 0 : index
    %30 = vector.load %arg12[%c0_24, %c0_25] : memref<1x128xf32, #tpu.memory_space<vmem>>, vector<1x128xf32>
    tpu.vector_store %arg12[%c0_24, %c0_25], %29 {strides = array<i32>} : memref<1x128xf32, #tpu.memory_space<vmem>>, vector<1x128xf32>,
    return
  }
  func.func @transform_0(%arg0: i32) -> (i32, i32) {
    %c0_i32 = arith.constant 0 : i32
    %c0_i32_0 = arith.constant 0 : i32
    return %arg0, %c0_i32 : i32, i32
  }
  func.func @transform_1(%arg0: i32) -> (i32, i32) {
    %c0_i32 = arith.constant 0 : i32
    %c0_i32_0 = arith.constant 0 : i32
    return %c0_i32, %arg0 : i32, i32
  }
  func.func @transform_2(%arg0: i32) -> (i32, i32) {
    %c0_i32 = arith.constant 0 : i32
    %c0_i32_0 = arith.constant 0 : i32
    %c0_i32_1 = arith.constant 0 : i32
    return %c0_i32, %c0_i32_0 : i32, i32
  }
  func.func @transform_3(%arg0: i32) -> (i32, i32) {
    %c0_i32 = arith.constant 0 : i32
    %c0_i32_0 = arith.constant 0 : i32
    %c0_i32_1 = arith.constant 0 : i32
    return %c0_i32, %c0_i32_0 : i32, i32
  }
  func.func @transform_4(%arg0: i32) -> (i32, i32) {
    %c0_i32 = arith.constant 0 : i32
    %c0_i32_0 = arith.constant 0 : i32
    %c0_i32_1 = arith.constant 0 : i32
    return %c0_i32, %c0_i32_0 : i32, i32
  }
  func.func @transform_5(%arg0: i32) -> (i32, i32) {
    %c0_i32 = arith.constant 0 : i32
    %c0_i32_0 = arith.constant 0 : i32
    %c0_i32_1 = arith.constant 0 : i32
    return %c0_i32, %c0_i32_0 : i32, i32
  }
  func.func @transform_6(%arg0: i32) -> (i32, i32) {
    %c0_i32 = arith.constant 0 : i32
    %c0_i32_0 = arith.constant 0 : i32
    %c0_i32_1 = arith.constant 0 : i32
    return %c0_i32, %c0_i32_0 : i32, i32
  }
  func.func @transform_7(%arg0: i32) -> (i32, i32) {
    %c0_i32 = arith.constant 0 : i32
    %c0_i32_0 = arith.constant 0 : i32
    %c0_i32_1 = arith.constant 0 : i32
    return %c0_i32, %c0_i32_0 : i32, i32
  }
  func.func @transform_8(%arg0: i32) -> (i32, i32) {
    %c0_i32 = arith.constant 0 : i32
    %c0_i32_0 = arith.constant 0 : i32
    %c0_i32_1 = arith.constant 0 : i32
    return %c0_i32, %c0_i32_0 : i32, i32
  }
  func.func @transform_9(%arg0: i32) -> (i32, i32) {
    %c0_i32 = arith.constant 0 : i32
    %c0_i32_0 = arith.constant 0 : i32
    %c0_i32_1 = arith.constant 0 : i32
    return %c0_i32, %c0_i32_0 : i32, i32
  }
  func.func @transform_10(%arg0: i32) -> (i32, i32) {
    %c0_i32 = arith.constant 0 : i32
    %c0_i32_0 = arith.constant 0 : i32
    %c0_i32_1 = arith.constant 0 : i32
    return %c0_i32, %c0_i32_0 : i32, i32
  }
  func.func @transform_11(%arg0: i32) -> (i32, i32) {
    %c0_i32 = arith.constant 0 : i32
    %c0_i32_0 = arith.constant 0 : i32
    return %c0_i32, %arg0 : i32, i32
  }
}

</mosaic_0001>

<llo_original>
// kernel: tpu_custom_call.1
$region0: #{tpu_custom_call.1}
  #allocation0 [shape = 'u32[]', space=smem, size = 0x4, offset = 0x4, fixed_abs, tag = 'smem constant byte address 0x4 - core index']
  #allocation1 [shape = 'u32[72,128]{1,0:T(1,128)}', space=vmem, size = 0x9000, scoped, tag = 'internal scratch']
  #allocation2 [shape = 'f32[1,1]{1,0:T(1,128)S(6)}', space=smem, size = 0x200, scoped, tag = 'scoped memory for tpu_custom_call.1']
  #allocation3 [shape = 'f32[1,1]{1,0:T(1,128)S(6)}', space=smem, size = 0x200, scoped, tag = 'scoped memory for tpu_custom_call.1']
  %s0 = inlined_call_operand.vmem [shape: f32[128,16], index: 0, kind: input, shape index: {}]
  %s1 = inlined_call_operand.vmem [shape: f32[1,128], index: 1, kind: input, shape index: {}]
  %s2 = inlined_call_operand.vmem [shape: f32[16,128], index: 2, kind: input, shape index: {}]
  %s3 = inlined_call_operand.hbm [shape: f32[1,128], index: 3, kind: input, shape index: {}]
  %s4 = inlined_call_operand.vmem [shape: f32[128,128], index: 4, kind: input, shape index: {}]
  %s5 = inlined_call_operand.hbm [shape: f32[1,128], index: 5, kind: input, shape index: {}]
  %s6 = inlined_call_operand.hbm [shape: f32[128,128], index: 6, kind: input, shape index: {}]
  %s7 = inlined_call_operand.hbm [shape: f32[1,128], index: 7, kind: input, shape index: {}]
  %s8 = inlined_call_operand.vmem [shape: f32[8,128], index: 8, kind: input, shape index: {}]
  %s9 = inlined_call_operand.<no memory space> [shape: f32[1,1], index: 9, kind: input, shape index: {}]
  %s10 = inlined_call_operand.<no memory space> [shape: f32[1,1], index: 10, kind: input, shape index: {}]
  %s11 = inlined_call_operand.hbm [shape: f32[1,128], index: 11, kind: output, shape index: {}]
  %s12 = sld [smem:[#allocation0]]
  $region70: #{tpu_custom_call.1} parent=0
    _
  %s14 = ssub.s32 1, %s12
  %s15 = scalar_select 0, %s14, %s12
  %16 = sst [smem:[#allocation2]] %s9
  %17 = sst [smem:[#allocation3]] %s10
  $region1: #{tpu_custom_call.1} parent=0
    #allocation4 [shape = 'u8[512]{0}', space=vmem, size = 0x400, scoped, tag = 'input window, operand 3, single buffered']
    #allocation5 [shape = 's32[1]{0}', space=sflag, size = 0x4, scoped, tag = 'scoped memory for tpu_custom_call.1']
    #allocation6 [shape = 's32[1]{0}', space=sflag, size = 0x4, scoped, tag = 'scoped memory for tpu_custom_call.1']
    #allocation7 [shape = 'u8[512]{0}', space=vmem, size = 0x400, scoped, tag = 'input window, operand 5, single buffered']
    #allocation8 [shape = 's32[1]{0}', space=sflag, size = 0x4, scoped, tag = 'scoped memory for tpu_custom_call.1']
    #allocation9 [shape = 'u8[65536]{0}', space=vmem, size = 0x10000, scoped, tag = 'input window, operand 6, single buffered']
    #allocation10 [shape = 'u8[512]{0}', space=vmem, size = 0x400, scoped, tag = 'input window, operand 7, single buffered']
    #allocation11 [shape = 's32[1]{0}', space=sflag, size = 0x4, scoped, tag = 'scoped memory for tpu_custom_call.1']
    #allocation12 [shape = 'u8[512]{0}', space=vmem, size = 0x400, scoped, tag = 'output window, operand 0, single buffered']
    %18 = vsyncpa [#allocation5], 0
    %19 = vsyncpa [#allocation8], 0
    %20 = vsyncpa [#allocation11], 0
    %21 = vsyncpa [#allocation6], 0
    // Predicated region
    $region2: #{tpu_custom_call.1} parent=1 // pred_check
      _
    $region3: #{tpu_custom_call.1} parent=1 // pred_check_branch
      %23 = sbr.rel (0) target = $region5
    $region4: #{tpu_custom_call.1} parent=1 // pred_region
      _
    $region5: #{tpu_custom_call.1} parent=1 // pred_fallthru
      _
    // Predicated region
    $region6: #{tpu_custom_call.1} parent=1 // pred_check
      _
    $region7: #{tpu_custom_call.1} parent=1 // pred_check_branch
      %25 = sbr.rel (0) target = $region9
    $region8: #{tpu_custom_call.1} parent=1 // pred_region
      _
    $region9: #{tpu_custom_call.1} parent=1 // pred_fallthru
      _
    // Predicated region
    $region10: #{tpu_custom_call.1} parent=1 // pred_check
      _
    $region11: #{tpu_custom_call.1} parent=1 // pred_check_branch
      %27 = sbr.rel (0) target = $region13
    $region12: #{tpu_custom_call.1} parent=1 // pred_region
      _
    $region13: #{tpu_custom_call.1} parent=1 // pred_fallthru
      _
    // Predicated region
    $region14: #{tpu_custom_call.1} parent=1 // pred_check
      _
    $region15: #{tpu_custom_call.1} parent=1 // pred_check_branch
      %29 = sbr.rel (0) target = $region17
    $region16: #{tpu_custom_call.1} parent=1 // pred_region
      %31 = vsyncadd [#allocation5], 0
      %s33 = sshll.u32 %s3, 4
      %s34 = int_to_ptr.hbm [resolvable:$true] %s33
      %s35 = sshll.u32 [#allocation4], 4
      %s36 = int_to_ptr.vmem [resolvable:$true] %s35
      %38 = dma.hbm_to_vmem [thread:$0]  %s34, 16, %s36, [#allocation5]
    $region17: #{tpu_custom_call.1} parent=1 // pred_fallthru
      _
    // Predicated region
    $region18: #{tpu_custom_call.1} parent=1 // pred_check
      _
    $region19: #{tpu_custom_call.1} parent=1 // pred_check_branch
      %40 = sbr.rel (0) target = $region21
    $region20: #{tpu_custom_call.1} parent=1 // pred_region
      _
    $region21: #{tpu_custom_call.1} parent=1 // pred_fallthru
      _
    // Predicated region
    $region22: #{tpu_custom_call.1} parent=1 // pred_check
      _
    $region23: #{tpu_custom_call.1} parent=1 // pred_check_branch
      %42 = sbr.rel (0) target = $region25
    $region24: #{tpu_custom_call.1} parent=1 // pred_region
      %44 = vsyncadd [#allocation8], 0
      %s46 = sshll.u32 %s5, 4
      %s47 = int_to_ptr.hbm [resolvable:$true] %s46
      %s48 = sshll.u32 [#allocation7], 4
      %s49 = int_to_ptr.vmem [resolvable:$true] %s48
      %51 = dma.hbm_to_vmem [thread:$0]  %s47, 16, %s49, [#allocation8]
    $region25: #{tpu_custom_call.1} parent=1 // pred_fallthru
      _
    // Predicated region
    $region26: #{tpu_custom_call.1} parent=1 // pred_check
      _
    $region27: #{tpu_custom_call.1} parent=1 // pred_check_branch
      %53 = sbr.rel (0) target = $region29
    $region28: #{tpu_custom_call.1} parent=1 // pred_region
      %55 = vsyncadd [#allocation8], 0
      %s56 = sshll.u32 %s6, 4
      %s57 = int_to_ptr.hbm [resolvable:$true] %s56
      %s58 = sshll.u32 [#allocation9], 4
      %s59 = int_to_ptr.vmem [resolvable:$true] %s58
      %64 = dma.hbm_to_vmem [thread:$0]  %s57, 2048, %s59, [#allocation8], 128, 128, 8
    $region29: #{tpu_custom_call.1} parent=1 // pred_fallthru
      _
    // Predicated region
    $region30: #{tpu_custom_call.1} parent=1 // pred_check
      _
    $region31: #{tpu_custom_call.1} parent=1 // pred_check_branch
      %66 = sbr.rel (0) target = $region33
    $region32: #{tpu_custom_call.1} parent=1 // pred_region
      %68 = vsyncadd [#allocation11], 0
      %s70 = sshll.u32 %s7, 4
      %s71 = int_to_ptr.hbm [resolvable:$true] %s70
      %s72 = sshll.u32 [#allocation10], 4
      %s73 = int_to_ptr.vmem [resolvable:$true] %s72
      %75 = dma.hbm_to_vmem [thread:$0]  %s71, 16, %s73, [#allocation11]
    $region33: #{tpu_custom_call.1} parent=1 // pred_fallthru
      _
    // Predicated region
    $region34: #{tpu_custom_call.1} parent=1 // pred_check
      _
    $region35: #{tpu_custom_call.1} parent=1 // pred_check_branch
      %77 = sbr.rel (0) target = $region37
    $region36: #{tpu_custom_call.1} parent=1 // pred_region
      _
    $region37: #{tpu_custom_call.1} parent=1 // pred_fallthru
      _
    // Predicated region
    $region38: #{tpu_custom_call.1} parent=1 // pred_check
      _
    $region39: #{tpu_custom_call.1} parent=1 // pred_check_branch
      %79 = sbr.rel (0) target = $region41
    $region40: #{tpu_custom_call.1} parent=1 // pred_region
      _
    $region41: #{tpu_custom_call.1} parent=1 // pred_fallthru
      _
    // Predicated region
    $region42: #{tpu_custom_call.1} parent=1 // pred_check
      _
    $region43: #{tpu_custom_call.1} parent=1 // pred_check_branch
      %81 = sbr.rel (0) target = $region45
    $region44: #{tpu_custom_call.1} parent=1 // pred_region
      _
    $region45: #{tpu_custom_call.1} parent=1 // pred_fallthru
      _
    // Predicated region
    $region46: #{tpu_custom_call.1} parent=1 // pred_check
      _
    $region47: #{tpu_custom_call.1} parent=1 // pred_check_branch
      %83 = sbr.rel (0) target = $region49
    $region48: #{tpu_custom_call.1} parent=1 // pred_region
      %85 = dma.done [#allocation5], 16
    $region49: #{tpu_custom_call.1} parent=1 // pred_fallthru
      _
    // Predicated region
    $region50: #{tpu_custom_call.1} parent=1 // pred_check
      _
    $region51: #{tpu_custom_call.1} parent=1 // pred_check_branch
      %87 = sbr.rel (0) target = $region53
    $region52: #{tpu_custom_call.1} parent=1 // pred_region
      %89 = dma.done [#allocation8], 16
    $region53: #{tpu_custom_call.1} parent=1 // pred_fallthru
      _
    // Predicated region
    $region54: #{tpu_custom_call.1} parent=1 // pred_check
      _
    $region55: #{tpu_custom_call.1} parent=1 // pred_check_branch
      %91 = sbr.rel (0) target = $region57
    $region56: #{tpu_custom_call.1} parent=1 // pred_region
      %93 = dma.done [#allocation8], 2048
    $region57: #{tpu_custom_call.1} parent=1 // pred_fallthru
      _
    // Predicated region
    $region58: #{tpu_custom_call.1} parent=1 // pred_check
      _
    $region59: #{tpu_custom_call.1} parent=1 // pred_check_branch
      %95 = sbr.rel (0) target = $region61
    $region60: #{tpu_custom_call.1} parent=1 // pred_region
      %97 = dma.done [#allocation11], 16
    $region61: #{tpu_custom_call.1} parent=1 // pred_fallthru
      _
    %v98 = vld [vmem:[%s0] sm:$0xff]
    %v99 = vld [vmem:[%s0 + $0x8] sm:$0xff]
    %v100 = vld [vmem:[%s0 + $0x10] sm:$0xff]
    %v101 = vld [vmem:[%s0 + $0x18] sm:$0xff]
    %v102 = vld [vmem:[%s0 + $0x20] sm:$0xff]
    %v103 = vld [vmem:[%s0 + $0x28] sm:$0xff]
    %v104 = vld [vmem:[%s0 + $0x30] sm:$0xff]
    %v105 = vld [vmem:[%s0 + $0x38] sm:$0xff]
    %v106 = vld [vmem:[%s0 + $0x40] sm:$0xff]
    %v107 = vld [vmem:[%s0 + $0x48] sm:$0xff]
    %v108 = vld [vmem:[%s0 + $0x50] sm:$0xff]
    %v109 = vld [vmem:[%s0 + $0x58] sm:$0xff]
    %v110 = vld [vmem:[%s0 + $0x60] sm:$0xff]
    %v111 = vld [vmem:[%s0 + $0x68] sm:$0xff]
    %v112 = vld [vmem:[%s0 + $0x70] sm:$0xff]
    %v113 = vld [vmem:[%s0 + $0x78] sm:$0xff]
    %v114 = vld [vmem:[%s2] sm:$0xff]
    %v115 = vld [vmem:[%s2 + $0x8] sm:$0xff]
    %v116 = vld [vmem:[#allocation4] sm:$0x1]
    %v118 = vperm.slane %v116, 0
    %vm120 = vcmask 130048
    %v122 = vsel %vm120, %v98, 0
    %v125 = vsel %vm120, %v99, 0
    %v128 = vsel %vm120, %v100, 0
    %v131 = vsel %vm120, %v101, 0
    %v134 = vsel %vm120, %v102, 0
    %v137 = vsel %vm120, %v103, 0
    %v140 = vsel %vm120, %v104, 0
    %v143 = vsel %vm120, %v105, 0
    %v146 = vsel %vm120, %v106, 0
    %v149 = vsel %vm120, %v107, 0
    %v152 = vsel %vm120, %v108, 0
    %v155 = vsel %vm120, %v109, 0
    %v158 = vsel %vm120, %v110, 0
    %v161 = vsel %vm120, %v111, 0
    %v164 = vsel %vm120, %v112, 0
    %v167 = vsel %vm120, %v113, 0
    %169 = vmatpush.msra.mxu0 0.0
    %170 = vmatpush.msra.mxu0 0.0
    %171 = vmatpush.msra.mxu0 0.0
    %172 = vmatpush.msra.mxu0 0.0
    %173 = vmatpush.msra.mxu0 0.0
    %174 = vmatpush.msra.mxu0 0.0
    %175 = vmatpush.msra.mxu0 0.0
    %176 = vmatpush.msra.mxu0 0.0
    %177 = vmatpush.msra.mxu0 0.0
    %178 = vmatpush.msra.mxu0 0.0
    %179 = vmatpush.msra.mxu0 0.0
    %180 = vmatpush.msra.mxu0 0.0
    %181 = vmatpush.msra.mxu0 0.0
    %182 = vmatpush.msra.mxu0 0.0
    %183 = vmatpush.msra.mxu0 %v115
    %184 = vmatpush.msra.mxu0 %v114
    %185 = vmatmul.f32.gmra.mxu0 %v122
    %v186 = vpop.f32.mrf.mxu0
    %v187 = vadd.f32 %v118, %v186
    %188 = vmatmul.f32.gmra.mxu0 %v125
    %v189 = vpop.f32.mrf.mxu0
    %v190 = vadd.f32 %v118, %v189
    %191 = vmatmul.f32.gmra.mxu0 %v128
    %v192 = vpop.f32.mrf.mxu0
    %v193 = vadd.f32 %v118, %v192
    %194 = vmatmul.f32.gmra.mxu0 %v131
    %v195 = vpop.f32.mrf.mxu0
    %v196 = vadd.f32 %v118, %v195
    %197 = vmatmul.f32.gmra.mxu0 %v134
    %v198 = vpop.f32.mrf.mxu0
    %v199 = vadd.f32 %v118, %v198
    %200 = vmatmul.f32.gmra.mxu0 %v137
    %v201 = vpop.f32.mrf.mxu0
    %v202 = vadd.f32 %v118, %v201
    %203 = vmatmul.f32.gmra.mxu0 %v140
    %v204 = vpop.f32.mrf.mxu0
    %v205 = vadd.f32 %v118, %v204
    %206 = vmatmul.f32.gmra.mxu0 %v143
    %v207 = vpop.f32.mrf.mxu0
    %v208 = vadd.f32 %v118, %v207
    %209 = vmatmul.f32.gmra.mxu0 %v146
    %v210 = vpop.f32.mrf.mxu0
    %v211 = vadd.f32 %v118, %v210
    %212 = vmatmul.f32.gmra.mxu0 %v149
    %v213 = vpop.f32.mrf.mxu0
    %v214 = vadd.f32 %v118, %v213
    %215 = vmatmul.f32.gmra.mxu0 %v152
    %v216 = vpop.f32.mrf.mxu0
    %v217 = vadd.f32 %v118, %v216
    %218 = vmatmul.f32.gmra.mxu0 %v155
    %v219 = vpop.f32.mrf.mxu0
    %v220 = vadd.f32 %v118, %v219
    %221 = vmatmul.f32.gmra.mxu0 %v158
    %v222 = vpop.f32.mrf.mxu0
    %v223 = vadd.f32 %v118, %v222
    %224 = vmatmul.f32.gmra.mxu0 %v161
    %v225 = vpop.f32.mrf.mxu0
    %v226 = vadd.f32 %v118, %v225
    %227 = vmatmul.f32.gmra.mxu0 %v164
    %v228 = vpop.f32.mrf.mxu0
    %v229 = vadd.f32 %v118, %v228
    %230 = vmatmul.f32.gmra.mxu0 %v167
    %v231 = vpop.f32.mrf.mxu0
    %v232 = vadd.f32 %v118, %v231
    %233 = vdwg.mxu0
    %v234 = vtanh.pop %v187
    %v235 = vtanh.pop %v190
    %v236 = vtanh.pop %v193
    %v237 = vtanh.pop %v196
    %v238 = vtanh.pop %v199
    %v239 = vtanh.pop %v202
    %v240 = vtanh.pop %v205
    %v241 = vtanh.pop %v208
    %v242 = vtanh.pop %v211
    %v243 = vtanh.pop %v214
    %v244 = vtanh.pop %v217
    %v245 = vtanh.pop %v220
    %v246 = vtanh.pop %v223
    %v247 = vtanh.pop %v226
    %v248 = vtanh.pop %v229
    %v249 = vtanh.pop %v232
    %v250 = vld [vmem:[%s4] sm:$0xff]
    %v251 = vld [vmem:[%s4 + $0x8] sm:$0xff]
    %v252 = vld [vmem:[%s4 + $0x10] sm:$0xff]
    %v253 = vld [vmem:[%s4 + $0x18] sm:$0xff]
    %v254 = vld [vmem:[%s4 + $0x20] sm:$0xff]
    %v255 = vld [vmem:[%s4 + $0x28] sm:$0xff]
    %v256 = vld [vmem:[%s4 + $0x30] sm:$0xff]
    %v257 = vld [vmem:[%s4 + $0x38] sm:$0xff]
    %v258 = vld [vmem:[%s4 + $0x40] sm:$0xff]
    %v259 = vld [vmem:[%s4 + $0x48] sm:$0xff]
    %v260 = vld [vmem:[%s4 + $0x50] sm:$0xff]
    %v261 = vld [vmem:[%s4 + $0x58] sm:$0xff]
    %v262 = vld [vmem:[%s4 + $0x60] sm:$0xff]
    %v263 = vld [vmem:[%s4 + $0x68] sm:$0xff]
    %v264 = vld [vmem:[%s4 + $0x70] sm:$0xff]
    %v265 = vld [vmem:[%s4 + $0x78] sm:$0xff]
    %v266 = vld [vmem:[#allocation7] sm:$0x1]
    %v268 = vperm.slane %v266, 0
    %270 = vmatpush.msra.mxu0 %v265
    %271 = vmatpush.msra.mxu0 %v264
    %272 = vmatpush.msra.mxu0 %v263
    %273 = vmatpush.msra.mxu0 %v262
    %274 = vmatpush.msra.mxu0 %v261
    %275 = vmatpush.msra.mxu0 %v260
    %276 = vmatpush.msra.mxu0 %v259
    %277 = vmatpush.msra.mxu0 %v258
    %278 = vmatpush.msra.mxu0 %v257
    %279 = vmatpush.msra.mxu0 %v256
    %280 = vmatpush.msra.mxu0 %v255
    %281 = vmatpush.msra.mxu0 %v254
    %282 = vmatpush.msra.mxu0 %v253
    %283 = vmatpush.msra.mxu0 %v252
    %284 = vmatpush.msra.mxu0 %v251
    %285 = vmatpush.msra.mxu0 %v250
    %286 = vmatmul.f32.gmra.mxu0 %v234
    %v287 = vpop.f32.mrf.mxu0
    %v288 = vadd.f32 %v268, %v287
    %289 = vmatmul.f32.gmra.mxu0 %v235
    %v290 = vpop.f32.mrf.mxu0
    %v291 = vadd.f32 %v268, %v290
    %292 = vmatmul.f32.gmra.mxu0 %v236
    %v293 = vpop.f32.mrf.mxu0
    %v294 = vadd.f32 %v268, %v293
    %295 = vmatmul.f32.gmra.mxu0 %v237
    %v296 = vpop.f32.mrf.mxu0
    %v297 = vadd.f32 %v268, %v296
    %298 = vmatmul.f32.gmra.mxu0 %v238
    %v299 = vpop.f32.mrf.mxu0
    %v300 = vadd.f32 %v268, %v299
    %301 = vmatmul.f32.gmra.mxu0 %v239
    %v302 = vpop.f32.mrf.mxu0
    %v303 = vadd.f32 %v268, %v302
    %304 = vmatmul.f32.gmra.mxu0 %v240
    %v305 = vpop.f32.mrf.mxu0
    %v306 = vadd.f32 %v268, %v305
    %307 = vmatmul.f32.gmra.mxu0 %v241
    %v308 = vpop.f32.mrf.mxu0
    %v309 = vadd.f32 %v268, %v308
    %310 = vmatmul.f32.gmra.mxu0 %v242
    %v311 = vpop.f32.mrf.mxu0
    %v312 = vadd.f32 %v268, %v311
    %313 = vmatmul.f32.gmra.mxu0 %v243
    %v314 = vpop.f32.mrf.mxu0
    %v315 = vadd.f32 %v268, %v314
    %316 = vmatmul.f32.gmra.mxu0 %v244
    %v317 = vpop.f32.mrf.mxu0
    %v318 = vadd.f32 %v268, %v317
    %319 = vmatmul.f32.gmra.mxu0 %v245
    %v320 = vpop.f32.mrf.mxu0
    %v321 = vadd.f32 %v268, %v320
    %322 = vmatmul.f32.gmra.mxu0 %v246
    %v323 = vpop.f32.mrf.mxu0
    %v324 = vadd.f32 %v268, %v323
    %325 = vmatmul.f32.gmra.mxu0 %v247
    %v326 = vpop.f32.mrf.mxu0
    %v327 = vadd.f32 %v268, %v326
    %328 = vmatmul.f32.gmra.mxu0 %v248
    %v329 = vpop.f32.mrf.mxu0
    %v330 = vadd.f32 %v268, %v329
    %331 = vmatmul.f32.gmra.mxu0 %v249
    %v332 = vpop.f32.mrf.mxu0
    %v333 = vadd.f32 %v268, %v332
    %334 = vdwg.mxu0
    %v335 = vtanh.pop %v288
    %v336 = vtanh.pop %v291
    %v337 = vtanh.pop %v294
    %v338 = vtanh.pop %v297
    %v339 = vtanh.pop %v300
    %v340 = vtanh.pop %v303
    %v341 = vtanh.pop %v306
    %v342 = vtanh.pop %v309
    %v343 = vtanh.pop %v312
    %v344 = vtanh.pop %v315
    %v345 = vtanh.pop %v318
    %v346 = vtanh.pop %v321
    %v347 = vtanh.pop %v324
    %v348 = vtanh.pop %v327
    %v349 = vtanh.pop %v330
    %v350 = vtanh.pop %v333
    %v351 = vld [vmem:[#allocation9] sm:$0xff]
    %v352 = vld [vmem:[#allocation9 + $0x8] sm:$0xff]
    %v353 = vld [vmem:[#allocation9 + $0x10] sm:$0xff]
    %v354 = vld [vmem:[#allocation9 + $0x18] sm:$0xff]
    %v355 = vld [vmem:[#allocation9 + $0x20] sm:$0xff]
    %v356 = vld [vmem:[#allocation9 + $0x28] sm:$0xff]
    %v357 = vld [vmem:[#allocation9 + $0x30] sm:$0xff]
    %v358 = vld [vmem:[#allocation9 + $0x38] sm:$0xff]
    %v359 = vld [vmem:[#allocation9 + $0x40] sm:$0xff]
    %v360 = vld [vmem:[#allocation9 + $0x48] sm:$0xff]
    %v361 = vld [vmem:[#allocation9 + $0x50] sm:$0xff]
    %v362 = vld [vmem:[#allocation9 + $0x58] sm:$0xff]
    %v363 = vld [vmem:[#allocation9 + $0x60] sm:$0xff]
    %v364 = vld [vmem:[#allocation9 + $0x68] sm:$0xff]
    %v365 = vld [vmem:[#allocation9 + $0x70] sm:$0xff]
    %v366 = vld [vmem:[#allocation9 + $0x78] sm:$0xff]
    %v367 = vld [vmem:[#allocation10] sm:$0x1]
    %v369 = vperm.slane %v367, 0
    %371 = vmatpush.msra.mxu0 %v366
    %372 = vmatpush.msra.mxu0 %v365
    %373 = vmatpush.msra.mxu0 %v364
    %374 = vmatpush.msra.mxu0 %v363
    %375 = vmatpush.msra.mxu0 %v362
    %376 = vmatpush.msra.mxu0 %v361
    %377 = vmatpush.msra.mxu0 %v360
    %378 = vmatpush.msra.mxu0 %v359
    %379 = vmatpush.msra.mxu0 %v358
    %380 = vmatpush.msra.mxu0 %v357
    %381 = vmatpush.msra.mxu0 %v356
    %382 = vmatpush.msra.mxu0 %v355
    %383 = vmatpush.msra.mxu0 %v354
    %384 = vmatpush.msra.mxu0 %v353
    %385 = vmatpush.msra.mxu0 %v352
    %386 = vmatpush.msra.mxu0 %v351
    %387 = vmatmul.f32.gmra.mxu0 %v335
    %v388 = vpop.f32.mrf.mxu0
    %v389 = vadd.f32 %v369, %v388
    %390 = vmatmul.f32.gmra.mxu0 %v336
    %v391 = vpop.f32.mrf.mxu0
    %v392 = vadd.f32 %v369, %v391
    %393 = vmatmul.f32.gmra.mxu0 %v337
    %v394 = vpop.f32.mrf.mxu0
    %v395 = vadd.f32 %v369, %v394
    %396 = vmatmul.f32.gmra.mxu0 %v338
    %v397 = vpop.f32.mrf.mxu0
    %v398 = vadd.f32 %v369, %v397
    %399 = vmatmul.f32.gmra.mxu0 %v339
    %v400 = vpop.f32.mrf.mxu0
    %v401 = vadd.f32 %v369, %v400
    %402 = vmatmul.f32.gmra.mxu0 %v340
    %v403 = vpop.f32.mrf.mxu0
    %v404 = vadd.f32 %v369, %v403
    %405 = vmatmul.f32.gmra.mxu0 %v341
    %v406 = vpop.f32.mrf.mxu0
    %v407 = vadd.f32 %v369, %v406
    %408 = vmatmul.f32.gmra.mxu0 %v342
    %v409 = vpop.f32.mrf.mxu0
    %v410 = vadd.f32 %v369, %v409
    %411 = vmatmul.f32.gmra.mxu0 %v343
    %v412 = vpop.f32.mrf.mxu0
    %v413 = vadd.f32 %v369, %v412
    %414 = vmatmul.f32.gmra.mxu0 %v344
    %v415 = vpop.f32.mrf.mxu0
    %v416 = vadd.f32 %v369, %v415
    %417 = vmatmul.f32.gmra.mxu0 %v345
    %v418 = vpop.f32.mrf.mxu0
    %v419 = vadd.f32 %v369, %v418
    %420 = vmatmul.f32.gmra.mxu0 %v346
    %v421 = vpop.f32.mrf.mxu0
    %v422 = vadd.f32 %v369, %v421
    %423 = vmatmul.f32.gmra.mxu0 %v347
    %v424 = vpop.f32.mrf.mxu0
    %v425 = vadd.f32 %v369, %v424
    %426 = vmatmul.f32.gmra.mxu0 %v348
    %v427 = vpop.f32.mrf.mxu0
    %v428 = vadd.f32 %v369, %v427
    %429 = vmatmul.f32.gmra.mxu0 %v349
    %v430 = vpop.f32.mrf.mxu0
    %v431 = vadd.f32 %v369, %v430
    %432 = vmatmul.f32.gmra.mxu0 %v350
    %v433 = vpop.f32.mrf.mxu0
    %v434 = vadd.f32 %v369, %v433
    %435 = vdwg.mxu0
    %v436 = vtanh.pop %v389
    %v437 = vtanh.pop %v392
    %v438 = vtanh.pop %v395
    %v439 = vtanh.pop %v398
    %v440 = vtanh.pop %v401
    %v441 = vtanh.pop %v404
    %v442 = vtanh.pop %v407
    %v443 = vtanh.pop %v410
    %v444 = vtanh.pop %v413
    %v445 = vtanh.pop %v416
    %v446 = vtanh.pop %v419
    %v447 = vtanh.pop %v422
    %v448 = vtanh.pop %v425
    %v449 = vtanh.pop %v428
    %v450 = vtanh.pop %v431
    %v451 = vtanh.pop %v434
    %v452 = vld [vmem:[%s8] sm:$0xff]
    %453 = vmatpush.xpose.msra.mxu0 %v451
    %454 = vmatpush.xpose.msra.mxu0 %v450
    %455 = vmatpush.xpose.msra.mxu0 %v449
    %456 = vmatpush.xpose.msra.mxu0 %v448
    %457 = vmatpush.xpose.msra.mxu0 %v447
    %458 = vmatpush.xpose.msra.mxu0 %v446
    %459 = vmatpush.xpose.msra.mxu0 %v445
    %460 = vmatpush.xpose.msra.mxu0 %v444
    %461 = vmatpush.xpose.msra.mxu0 %v443
    %462 = vmatpush.xpose.msra.mxu0 %v442
    %463 = vmatpush.xpose.msra.mxu0 %v441
    %464 = vmatpush.xpose.msra.mxu0 %v440
    %465 = vmatpush.xpose.msra.mxu0 %v439
    %466 = vmatpush.xpose.msra.mxu0 %v438
    %467 = vmatpush.xpose.msra.mxu0 %v437
    %468 = vmatpush.xpose.msra.mxu0 %v436
    %469 = vmatmul.f32.gmra.mxu0 %v452
    %v470 = vpop.f32.mrf.mxu0
    %v471 = vadd.f32 0.0, %v470
    %472 = vdwg.mxu0
    %v473 = vld [vmem:[%s1] sm:$0x1]
    %s474 = sld [smem:[#allocation2]]
    %v475 = vstv %s474
    %v476 = vmul.f32 %v473, %v475
    %v477 = vadd.f32 %v471, %v476
    %s478 = sld [smem:[#allocation3]]
    %v479 = vstv %s478
    %v480 = vadd.f32 %v477, %v479
    %481 = vst [vmem:[#allocation12] sm:$0x1] %v480
    // Predicated region
    $region62: #{tpu_custom_call.1} parent=1 // pred_check
      _
    $region63: #{tpu_custom_call.1} parent=1 // pred_check_branch
      %483 = sbr.rel (0) target = $region65
    $region64: #{tpu_custom_call.1} parent=1 // pred_region
      %485 = vsyncadd [#allocation6], 0
      %s487 = sshll.u32 [#allocation12], 4
      %s488 = int_to_ptr.vmem [resolvable:$true] %s487
      %s489 = sshll.u32 %s11, 4
      %s490 = int_to_ptr.hbm [resolvable:$true] %s489
      %492 = dma.vmem_to_hbm [thread:$0]  %s488, 16, %s490, [#allocation6]
    $region65: #{tpu_custom_call.1} parent=1 // pred_fallthru
      _
    // Predicated region
    $region66: #{tpu_custom_call.1} parent=1 // pred_check
      _
    $region67: #{tpu_custom_call.1} parent=1 // pred_check_branch
      %494 = sbr.rel (0) target = $region69
    $region68: #{tpu_custom_call.1} parent=1 // pred_region
      %496 = dma.done [#allocation6], 16
    $region69: #{tpu_custom_call.1} parent=1 // pred_fallthru
      _
    %497 = vsyncpa [#allocation5], 1
    %498 = vsyncpa [#allocation8], 1
    %499 = vsyncpa [#allocation11], 1
    %500 = vsyncpa [#allocation6], 1

// kernel: tpu_custom_call.1
$region0: #{tpu_custom_call.1}
  #allocation0 [shape = 'u32[]', space=smem, size = 0x4, offset = 0x4, fixed_abs, tag = 'smem constant byte address 0x4 - core index']
  #allocation1 [shape = 'u32[72,128]{1,0:T(1,128)}', space=vmem, size = 0x9000, scoped, tag = 'internal scratch']
  #allocation2 [shape = 'f32[1,1]{1,0:T(1,128)S(6)}', space=smem, size = 0x200, scoped, tag = 'scoped memory for tpu_custom_call.1']
  #allocation3 [shape = 'f32[1,1]{1,0:T(1,128)S(6)}', space=smem, size = 0x200, scoped, tag = 'scoped memory for tpu_custom_call.1']
  %s0 = inlined_call_operand.vmem [shape: f32[128,16], index: 0, kind: input, shape index: {}]
  %s1 = inlined_call_operand.vmem [shape: f32[1,128], index: 1, kind: input, shape index: {}]
  %s2 = inlined_call_operand.vmem [shape: f32[16,128], index: 2, kind: input, shape index: {}]
  %s3 = inlined_call_operand.hbm [shape: f32[1,128], index: 3, kind: input, shape index: {}]
  %s4 = inlined_call_operand.vmem [shape: f32[128,128], index: 4, kind: input, shape index: {}]
  %s5 = inlined_call_operand.hbm [shape: f32[1,128], index: 5, kind: input, shape index: {}]
  %s6 = inlined_call_operand.hbm [shape: f32[128,128], index: 6, kind: input, shape index: {}]
  %s7 = inlined_call_operand.hbm [shape: f32[1,128], index: 7, kind: input, shape index: {}]
  %s8 = inlined_call_operand.vmem [shape: f32[8,128], index: 8, kind: input, shape index: {}]
  %s9 = inlined_call_operand.<no memory space> [shape: f32[1,1], index: 9, kind: input, shape index: {}]
  %s10 = inlined_call_operand.<no memory space> [shape: f32[1,1], index: 10, kind: input, shape index: {}]
  %s11 = inlined_call_operand.hbm [shape: f32[1,128], index: 11, kind: output, shape index: {}]
  %s12 = sld [smem:[#allocation0]]
  $region70: #{tpu_custom_call.1} parent=0
    _
  %s14 = ssub.s32 1, %s12
  %s15 = scalar_select 0, %s14, %s12
  %16 = sst [smem:[#allocation2]] %s9
  %17 = sst [smem:[#allocation3]] %s10
  $region1: #{tpu_custom_call.1} parent=0
    #allocation4 [shape = 'u8[512]{0}', space=vmem, size = 0x400, scoped, tag = 'input window, operand 3, single buffered']
    #allocation5 [shape = 's32[1]{0}', space=sflag, size = 0x4, scoped, tag = 'scoped memory for tpu_custom_call.1']
    #allocation6 [shape = 's32[1]{0}', space=sflag, size = 0x4, scoped, tag = 'scoped memory for tpu_custom_call.1']
    #allocation7 [shape = 'u8[512]{0}', space=vmem, size = 0x400, scoped, tag = 'input window, operand 5, single buffered']
    #allocation8 [shape = 's32[1]{0}', space=sflag, size = 0x4, scoped, tag = 'scoped memory for tpu_custom_call.1']
    #allocation9 [shape = 'u8[65536]{0}', space=vmem, size = 0x10000, scoped, tag = 'input window, operand 6, single buffered']
    #allocation10 [shape = 'u8[512]{0}', space=vmem, size = 0x400, scoped, tag = 'input window, operand 7, single buffered']
    #allocation11 [shape = 's32[1]{0}', space=sflag, size = 0x4, scoped, tag = 'scoped memory for tpu_custom_call.1']
    #allocation12 [shape = 'u8[512]{0}', space=vmem, size = 0x400, scoped, tag = 'output window, operand 0, single buffered']
    %18 = vsyncpa [#allocation5], 0
    %19 = vsyncpa [#allocation8], 0
    %20 = vsyncpa [#allocation11], 0
    %21 = vsyncpa [#allocation6], 0
    // Predicated region
    $region2: #{tpu_custom_call.1} parent=1 // pred_check
      _
    $region3: #{tpu_custom_call.1} parent=1 // pred_check_branch
      %23 = sbr.rel (0) target = $region5
    $region4: #{tpu_custom_call.1} parent=1 // pred_region
      _
    $region5: #{tpu_custom_call.1} parent=1 // pred_fallthru
      _
    // Predicated region
    $region6: #{tpu_custom_call.1} parent=1 // pred_check
      _
    $region7: #{tpu_custom_call.1} parent=1 // pred_check_branch
      %25 = sbr.rel (0) target = $region9
    $region8: #{tpu_custom_call.1} parent=1 // pred_region
      _
    $region9: #{tpu_custom_call.1} parent=1 // pred_fallthru
      _
    // Predicated region
    $region10: #{tpu_custom_call.1} parent=1 // pred_check
      _
    $region11: #{tpu_custom_call.1} parent=1 // pred_check_branch
      %27 = sbr.rel (0) target = $region13
    $region12: #{tpu_custom_call.1} parent=1 // pred_region
      _
    $region13: #{tpu_custom_call.1} parent=1 // pred_fallthru
      _
    // Predicated region
    $region14: #{tpu_custom_call.1} parent=1 // pred_check
      _
    $region15: #{tpu_custom_call.1} parent=1 // pred_check_branch
      %29 = sbr.rel (0) target = $region17
    $region16: #{tpu_custom_call.1} parent=1 // pred_region
      %31 = vsyncadd [#allocation5], 0
      %s33 = sshll.u32 %s3, 4
      %s34 = int_to_ptr.hbm [resolvable:$true] %s33
      %s35 = sshll.u32 [#allocation4], 4
      %s36 = int_to_ptr.vmem [resolvable:$true] %s35
      %38 = dma.hbm_to_vmem [thread:$0]  %s34, 16, %s36, [#allocation5]
    $region17: #{tpu_custom_call.1} parent=1 // pred_fallthru
      _
    // Predicated region
    $region18: #{tpu_custom_call.1} parent=1 // pred_check
      _
    $region19: #{tpu_custom_call.1} parent=1 // pred_check_branch
      %40 = sbr.rel (0) target = $region21
    $region20: #{tpu_custom_call.1} parent=1 // pred_region
      _
    $region21: #{tpu_custom_call.1} parent=1 // pred_fallthru
      _
    // Predicated region
    $region22: #{tpu_custom_call.1} parent=1 // pred_check
      _
    $region23: #{tpu_custom_call.1} parent=1 // pred_check_branch
      %42 = sbr.rel (0) target = $region25
    $region24: #{tpu_custom_call.1} parent=1 // pred_region
      %44 = vsyncadd [#allocation8], 0
      %s46 = sshll.u32 %s5, 4
      %s47 = int_to_ptr.hbm [resolvable:$true] %s46
      %s48 = sshll.u32 [#allocation7], 4
      %s49 = int_to_ptr.vmem [resolvable:$true] %s48
      %51 = dma.hbm_to_vmem [thread:$0]  %s47, 16, %s49, [#allocation8]
    $region25: #{tpu_custom_call.1} parent=1 // pred_fallthru
      _
    // Predicated region
    $region26: #{tpu_custom_call.1} parent=1 // pred_check
      _
    $region27: #{tpu_custom_call.1} parent=1 // pred_check_branch
      %53 = sbr.rel (0) target = $region29
    $region28: #{tpu_custom_call.1} parent=1 // pred_region
      %55 = vsyncadd [#allocation8], 0
      %s56 = sshll.u32 %s6, 4
      %s57 = int_to_ptr.hbm [resolvable:$true] %s56
      %s58 = sshll.u32 [#allocation9], 4
      %s59 = int_to_ptr.vmem [resolvable:$true] %s58
      %64 = dma.hbm_to_vmem [thread:$0]  %s57, 2048, %s59, [#allocation8], 128, 128, 8
    $region29: #{tpu_custom_call.1} parent=1 // pred_fallthru
      _
    // Predicated region
    $region30: #{tpu_custom_call.1} parent=1 // pred_check
      _
    $region31: #{tpu_custom_call.1} parent=1 // pred_check_branch
      %66 = sbr.rel (0) target = $region33
    $region32: #{tpu_custom_call.1} parent=1 // pred_region
      %68 = vsyncadd [#allocation11], 0
      %s70 = sshll.u32 %s7, 4
      %s71 = int_to_ptr.hbm [resolvable:$true] %s70
      %s72 = sshll.u32 [#allocation10], 4
      %s73 = int_to_ptr.vmem [resolvable:$true] %s72
      %75 = dma.hbm_to_vmem [thread:$0]  %s71, 16, %s73, [#allocation11]
    $region33: #{tpu_custom_call.1} parent=1 // pred_fallthru
      _
    // Predicated region
    $region34: #{tpu_custom_call.1} parent=1 // pred_check
      _
    $region35: #{tpu_custom_call.1} parent=1 // pred_check_branch
      %77 = sbr.rel (0) target = $region37
    $region36: #{tpu_custom_call.1} parent=1 // pred_region
      _
    $region37: #{tpu_custom_call.1} parent=1 // pred_fallthru
      _
    // Predicated region
    $region38: #{tpu_custom_call.1} parent=1 // pred_check
      _
    $region39: #{tpu_custom_call.1} parent=1 // pred_check_branch
      %79 = sbr.rel (0) target = $region41
    $region40: #{tpu_custom_call.1} parent=1 // pred_region
      _
    $region41: #{tpu_custom_call.1} parent=1 // pred_fallthru
      _
    // Predicated region
    $region42: #{tpu_custom_call.1} parent=1 // pred_check
      _
    $region43: #{tpu_custom_call.1} parent=1 // pred_check_branch
      %81 = sbr.rel (0) target = $region45
    $region44: #{tpu_custom_call.1} parent=1 // pred_region
      _
    $region45: #{tpu_custom_call.1} parent=1 // pred_fallthru
      _
    // Predicated region
    $region46: #{tpu_custom_call.1} parent=1 // pred_check
      _
    $region47: #{tpu_custom_call.1} parent=1 // pred_check_branch
      %83 = sbr.rel (0) target = $region49
    $region48: #{tpu_custom_call.1} parent=1 // pred_region
      %85 = dma.done [#allocation5], 16
    $region49: #{tpu_custom_call.1} parent=1 // pred_fallthru
      _
    // Predicated region
    $region50: #{tpu_custom_call.1} parent=1 // pred_check
      _
    $region51: #{tpu_custom_call.1} parent=1 // pred_check_branch
      %87 = sbr.rel (0) target = $region53
    $region52: #{tpu_custom_call.1} parent=1 // pred_region
      %89 = dma.done [#allocation8], 16
    $region53: #{tpu_custom_call.1} parent=1 // pred_fallthru
      _
    // Predicated region
    $region54: #{tpu_custom_call.1} parent=1 // pred_check
      _
    $region55: #{tpu_custom_call.1} parent=1 // pred_check_branch
      %91 = sbr.rel (0) target = $region57
    $region56: #{tpu_custom_call.1} parent=1 // pred_region
      %93 = dma.done [#allocation8], 2048
    $region57: #{tpu_custom_call.1} parent=1 // pred_fallthru
      _
    // Predicated region
    $region58: #{tpu_custom_call.1} parent=1 // pred_check
      _
    $region59: #{tpu_custom_call.1} parent=1 // pred_check_branch
      %95 = sbr.rel (0) target = $region61
    $region60: #{tpu_custom_call.1} parent=1 // pred_region
      %97 = dma.done [#allocation11], 16
    $region61: #{tpu_custom_call.1} parent=1 // pred_fallthru
      _
    %v98 = vld [vmem:[%s0] sm:$0xff]
    %v99 = vld [vmem:[%s0 + $0x8] sm:$0xff]
    %v100 = vld [vmem:[%s0 + $0x10] sm:$0xff]
    %v101 = vld [vmem:[%s0 + $0x18] sm:$0xff]
    %v102 = vld [vmem:[%s0 + $0x20] sm:$0xff]
    %v103 = vld [vmem:[%s0 + $0x28] sm:$0xff]
    %v104 = vld [vmem:[%s0 + $0x30] sm:$0xff]
    %v105 = vld [vmem:[%s0 + $0x38] sm:$0xff]
    %v106 = vld [vmem:[%s0 + $0x40] sm:$0xff]
    %v107 = vld [vmem:[%s0 + $0x48] sm:$0xff]
    %v108 = vld [vmem:[%s0 + $0x50] sm:$0xff]
    %v109 = vld [vmem:[%s0 + $0x58] sm:$0xff]
    %v110 = vld [vmem:[%s0 + $0x60] sm:$0xff]
    %v111 = vld [vmem:[%s0 + $0x68] sm:$0xff]
    %v112 = vld [vmem:[%s0 + $0x70] sm:$0xff]
    %v113 = vld [vmem:[%s0 + $0x78] sm:$0xff]
    %v114 = vld [vmem:[%s2] sm:$0xff]
    %v115 = vld [vmem:[%s2 + $0x8] sm:$0xff]
    %v116 = vld [vmem:[#allocation4] sm:$0x1]
    %v118 = vperm.slane %v116, 0
    %vm120 = vcmask 130048
    %v122 = vsel %vm120, %v98, 0
    %v125 = vsel %vm120, %v99, 0
    %v128 = vsel %vm120, %v100, 0
    %v131 = vsel %vm120, %v101, 0
    %v134 = vsel %vm120, %v102, 0
    %v137 = vsel %vm120, %v103, 0
    %v140 = vsel %vm120, %v104, 0
    %v143 = vsel %vm120, %v105, 0
    %v146 = vsel %vm120, %v106, 0
    %v149 = vsel %vm120, %v107, 0
    %v152 = vsel %vm120, %v108, 0
    %v155 = vsel %vm120, %v109, 0
    %v158 = vsel %vm120, %v110, 0
    %v161 = vsel %vm120, %v111, 0
    %v164 = vsel %vm120, %v112, 0
    %v167 = vsel %vm120, %v113, 0
    %169 = vmatpush.msra.mxu0 0.0
    %170 = vmatpush.msra.mxu0 0.0
    %171 = vmatpush.msra.mxu0 0.0
    %172 = vmatpush.msra.mxu0 0.0
    %173 = vmatpush.msra.mxu0 0.0
    %174 = vmatpush.msra.mxu0 0.0
    %175 = vmatpush.msra.mxu0 0.0
    %176 = vmatpush.msra.mxu0 0.0
    %177 = vmatpush.msra.mxu0 0.0
    %178 = vmatpush.msra.mxu0 0.0
    %179 = vmatpush.msra.mxu0 0.0
    %180 = vmatpush.msra.mxu0 0.0
    %181 = vmatpush.msra.mxu0 0.0
    %182 = vmatpush.msra.mxu0 0.0
    %183 = vmatpush.msra.mxu0 %v115
    %184 = vmatpush.msra.mxu0 %v114
    %185 = vmatmul.f32.gmra.mxu0 %v122
    %v186 = vpop.f32.mrf.mxu0
    %v187 = vadd.f32 %v118, %v186
    %188 = vmatmul.f32.gmra.mxu0 %v125
    %v189 = vpop.f32.mrf.mxu0
    %v190 = vadd.f32 %v118, %v189
    %191 = vmatmul.f32.gmra.mxu0 %v128
    %v192 = vpop.f32.mrf.mxu0
    %v193 = vadd.f32 %v118, %v192
    %194 = vmatmul.f32.gmra.mxu0 %v131
    %v195 = vpop.f32.mrf.mxu0
    %v196 = vadd.f32 %v118, %v195
    %197 = vmatmul.f32.gmra.mxu0 %v134
    %v198 = vpop.f32.mrf.mxu0
    %v199 = vadd.f32 %v118, %v198
    %200 = vmatmul.f32.gmra.mxu0 %v137
    %v201 = vpop.f32.mrf.mxu0
    %v202 = vadd.f32 %v118, %v201
    %203 = vmatmul.f32.gmra.mxu0 %v140
    %v204 = vpop.f32.mrf.mxu0
    %v205 = vadd.f32 %v118, %v204
    %206 = vmatmul.f32.gmra.mxu0 %v143
    %v207 = vpop.f32.mrf.mxu0
    %v208 = vadd.f32 %v118, %v207
    %209 = vmatmul.f32.gmra.mxu0 %v146
    %v210 = vpop.f32.mrf.mxu0
    %v211 = vadd.f32 %v118, %v210
    %212 = vmatmul.f32.gmra.mxu0 %v149
    %v213 = vpop.f32.mrf.mxu0
    %v214 = vadd.f32 %v118, %v213
    %215 = vmatmul.f32.gmra.mxu0 %v152
    %v216 = vpop.f32.mrf.mxu0
    %v217 = vadd.f32 %v118, %v216
    %218 = vmatmul.f32.gmra.mxu0 %v155
    %v219 = vpop.f32.mrf.mxu0
    %v220 = vadd.f32 %v118, %v219
    %221 = vmatmul.f32.gmra.mxu0 %v158
    %v222 = vpop.f32.mrf.mxu0
    %v223 = vadd.f32 %v118, %v222
    %224 = vmatmul.f32.gmra.mxu0 %v161
    %v225 = vpop.f32.mrf.mxu0
    %v226 = vadd.f32 %v118, %v225
    %227 = vmatmul.f32.gmra.mxu0 %v164
    %v228 = vpop.f32.mrf.mxu0
    %v229 = vadd.f32 %v118, %v228
    %230 = vmatmul.f32.gmra.mxu0 %v167
    %v231 = vpop.f32.mrf.mxu0
    %v232 = vadd.f32 %v118, %v231
    %233 = vdwg.mxu0
    %v234 = vtanh.pop %v187
    %v235 = vtanh.pop %v190
    %v236 = vtanh.pop %v193
    %v237 = vtanh.pop %v196
    %v238 = vtanh.pop %v199
    %v239 = vtanh.pop %v202
    %v240 = vtanh.pop %v205
    %v241 = vtanh.pop %v208
    %v242 = vtanh.pop %v211
    %v243 = vtanh.pop %v214
    %v244 = vtanh.pop %v217
    %v245 = vtanh.pop %v220
    %v246 = vtanh.pop %v223
    %v247 = vtanh.pop %v226
    %v248 = vtanh.pop %v229
    %v249 = vtanh.pop %v232
    %v250 = vld [vmem:[%s4] sm:$0xff]
    %v251 = vld [vmem:[%s4 + $0x8] sm:$0xff]
    %v252 = vld [vmem:[%s4 + $0x10] sm:$0xff]
    %v253 = vld [vmem:[%s4 + $0x18] sm:$0xff]
    %v254 = vld [vmem:[%s4 + $0x20] sm:$0xff]
    %v255 = vld [vmem:[%s4 + $0x28] sm:$0xff]
    %v256 = vld [vmem:[%s4 + $0x30] sm:$0xff]
    %v257 = vld [vmem:[%s4 + $0x38] sm:$0xff]
    %v258 = vld [vmem:[%s4 + $0x40] sm:$0xff]
    %v259 = vld [vmem:[%s4 + $0x48] sm:$0xff]
    %v260 = vld [vmem:[%s4 + $0x50] sm:$0xff]
    %v261 = vld [vmem:[%s4 + $0x58] sm:$0xff]
    %v262 = vld [vmem:[%s4 + $0x60] sm:$0xff]
    %v263 = vld [vmem:[%s4 + $0x68] sm:$0xff]
    %v264 = vld [vmem:[%s4 + $0x70] sm:$0xff]
    %v265 = vld [vmem:[%s4 + $0x78] sm:$0xff]
    %v266 = vld [vmem:[#allocation7] sm:$0x1]
    %v268 = vperm.slane %v266, 0
    %270 = vmatpush.msra.mxu0 %v265
    %271 = vmatpush.msra.mxu0 %v264
    %272 = vmatpush.msra.mxu0 %v263
    %273 = vmatpush.msra.mxu0 %v262
    %274 = vmatpush.msra.mxu0 %v261
    %275 = vmatpush.msra.mxu0 %v260
    %276 = vmatpush.msra.mxu0 %v259
    %277 = vmatpush.msra.mxu0 %v258
    %278 = vmatpush.msra.mxu0 %v257
    %279 = vmatpush.msra.mxu0 %v256
    %280 = vmatpush.msra.mxu0 %v255
    %281 = vmatpush.msra.mxu0 %v254
    %282 = vmatpush.msra.mxu0 %v253
    %283 = vmatpush.msra.mxu0 %v252
    %284 = vmatpush.msra.mxu0 %v251
    %285 = vmatpush.msra.mxu0 %v250
    %286 = vmatmul.f32.gmra.mxu0 %v234
    %v287 = vpop.f32.mrf.mxu0
    %v288 = vadd.f32 %v268, %v287
    %289 = vmatmul.f32.gmra.mxu0 %v235
    %v290 = vpop.f32.mrf.mxu0
    %v291 = vadd.f32 %v268, %v290
    %292 = vmatmul.f32.gmra.mxu0 %v236
    %v293 = vpop.f32.mrf.mxu0
    %v294 = vadd.f32 %v268, %v293
    %295 = vmatmul.f32.gmra.mxu0 %v237
    %v296 = vpop.f32.mrf.mxu0
    %v297 = vadd.f32 %v268, %v296
    %298 = vmatmul.f32.gmra.mxu0 %v238
    %v299 = vpop.f32.mrf.mxu0
    %v300 = vadd.f32 %v268, %v299
    %301 = vmatmul.f32.gmra.mxu0 %v239
    %v302 = vpop.f32.mrf.mxu0
    %v303 = vadd.f32 %v268, %v302
    %304 = vmatmul.f32.gmra.mxu0 %v240
    %v305 = vpop.f32.mrf.mxu0
    %v306 = vadd.f32 %v268, %v305
    %307 = vmatmul.f32.gmra.mxu0 %v241
    %v308 = vpop.f32.mrf.mxu0
    %v309 = vadd.f32 %v268, %v308
    %310 = vmatmul.f32.gmra.mxu0 %v242
    %v311 = vpop.f32.mrf.mxu0
    %v312 = vadd.f32 %v268, %v311
    %313 = vmatmul.f32.gmra.mxu0 %v243
    %v314 = vpop.f32.mrf.mxu0
    %v315 = vadd.f32 %v268, %v314
    %316 = vmatmul.f32.gmra.mxu0 %v244
    %v317 = vpop.f32.mrf.mxu0
    %v318 = vadd.f32 %v268, %v317
    %319 = vmatmul.f32.gmra.mxu0 %v245
    %v320 = vpop.f32.mrf.mxu0
    %v321 = vadd.f32 %v268, %v320
    %322 = vmatmul.f32.gmra.mxu0 %v246
    %v323 = vpop.f32.mrf.mxu0
    %v324 = vadd.f32 %v268, %v323
    %325 = vmatmul.f32.gmra.mxu0 %v247
    %v326 = vpop.f32.mrf.mxu0
    %v327 = vadd.f32 %v268, %v326
    %328 = vmatmul.f32.gmra.mxu0 %v248
    %v329 = vpop.f32.mrf.mxu0
    %v330 = vadd.f32 %v268, %v329
    %331 = vmatmul.f32.gmra.mxu0 %v249
    %v332 = vpop.f32.mrf.mxu0
    %v333 = vadd.f32 %v268, %v332
    %334 = vdwg.mxu0
    %v335 = vtanh.pop %v288
    %v336 = vtanh.pop %v291
    %v337 = vtanh.pop %v294
    %v338 = vtanh.pop %v297
    %v339 = vtanh.pop %v300
    %v340 = vtanh.pop %v303
    %v341 = vtanh.pop %v306
    %v342 = vtanh.pop %v309
    %v343 = vtanh.pop %v312
    %v344 = vtanh.pop %v315
    %v345 = vtanh.pop %v318
    %v346 = vtanh.pop %v321
    %v347 = vtanh.pop %v324
    %v348 = vtanh.pop %v327
    %v349 = vtanh.pop %v330
    %v350 = vtanh.pop %v333
    %v351 = vld [vmem:[#allocation9] sm:$0xff]
    %v352 = vld [vmem:[#allocation9 + $0x8] sm:$0xff]
    %v353 = vld [vmem:[#allocation9 + $0x10] sm:$0xff]
    %v354 = vld [vmem:[#allocation9 + $0x18] sm:$0xff]
    %v355 = vld [vmem:[#allocation9 + $0x20] sm:$0xff]
    %v356 = vld [vmem:[#allocation9 + $0x28] sm:$0xff]
    %v357 = vld [vmem:[#allocation9 + $0x30] sm:$0xff]
    %v358 = vld [vmem:[#allocation9 + $0x38] sm:$0xff]
    %v359 = vld [vmem:[#allocation9 + $0x40] sm:$0xff]
    %v360 = vld [vmem:[#allocation9 + $0x48] sm:$0xff]
    %v361 = vld [vmem:[#allocation9 + $0x50] sm:$0xff]
    %v362 = vld [vmem:[#allocation9 + $0x58] sm:$0xff]
    %v363 = vld [vmem:[#allocation9 + $0x60] sm:$0xff]
    %v364 = vld [vmem:[#allocation9 + $0x68] sm:$0xff]
    %v365 = vld [vmem:[#allocation9 + $0x70] sm:$0xff]
    %v366 = vld [vmem:[#allocation9 + $0x78] sm:$0xff]
    %v367 = vld [vmem:[#allocation10] sm:$0x1]
    %v369 = vperm.slane %v367, 0
    %371 = vmatpush.msra.mxu0 %v366
    %372 = vmatpush.msra.mxu0 %v365
    %373 = vmatpush.msra.mxu0 %v364
    %374 = vmatpush.msra.mxu0 %v363
    %375 = vmatpush.msra.mxu0 %v362
    %376 = vmatpush.msra.mxu0 %v361
    %377 = vmatpush.msra.mxu0 %v360
    %378 = vmatpush.msra.mxu0 %v359
    %379 = vmatpush.msra.mxu0 %v358
    %380 = vmatpush.msra.mxu0 %v357
    %381 = vmatpush.msra.mxu0 %v356
    %382 = vmatpush.msra.mxu0 %v355
    %383 = vmatpush.msra.mxu0 %v354
    %384 = vmatpush.msra.mxu0 %v353
    %385 = vmatpush.msra.mxu0 %v352
    %386 = vmatpush.msra.mxu0 %v351
    %387 = vmatmul.f32.gmra.mxu0 %v335
    %v388 = vpop.f32.mrf.mxu0
    %v389 = vadd.f32 %v369, %v388
    %390 = vmatmul.f32.gmra.mxu0 %v336
    %v391 = vpop.f32.mrf.mxu0
    %v392 = vadd.f32 %v369, %v391
    %393 = vmatmul.f32.gmra.mxu0 %v337
    %v394 = vpop.f32.mrf.mxu0
    %v395 = vadd.f32 %v369, %v394
    %396 = vmatmul.f32.gmra.mxu0 %v338
    %v397 = vpop.f32.mrf.mxu0
    %v398 = vadd.f32 %v369, %v397
    %399 = vmatmul.f32.gmra.mxu0 %v339
    %v400 = vpop.f32.mrf.mxu0
    %v401 = vadd.f32 %v369, %v400
    %402 = vmatmul.f32.gmra.mxu0 %v340
    %v403 = vpop.f32.mrf.mxu0
    %v404 = vadd.f32 %v369, %v403
    %405 = vmatmul.f32.gmra.mxu0 %v341
    %v406 = vpop.f32.mrf.mxu0
    %v407 = vadd.f32 %v369, %v406
    %408 = vmatmul.f32.gmra.mxu0 %v342
    %v409 = vpop.f32.mrf.mxu0
    %v410 = vadd.f32 %v369, %v409
    %411 = vmatmul.f32.gmra.mxu0 %v343
    %v412 = vpop.f32.mrf.mxu0
    %v413 = vadd.f32 %v369, %v412
    %414 = vmatmul.f32.gmra.mxu0 %v344
    %v415 = vpop.f32.mrf.mxu0
    %v416 = vadd.f32 %v369, %v415
    %417 = vmatmul.f32.gmra.mxu0 %v345
    %v418 = vpop.f32.mrf.mxu0
    %v419 = vadd.f32 %v369, %v418
    %420 = vmatmul.f32.gmra.mxu0 %v346
    %v421 = vpop.f32.mrf.mxu0
    %v422 = vadd.f32 %v369, %v421
    %423 = vmatmul.f32.gmra.mxu0 %v347
    %v424 = vpop.f32.mrf.mxu0
    %v425 = vadd.f32 %v369, %v424
    %426 = vmatmul.f32.gmra.mxu0 %v348
    %v427 = vpop.f32.mrf.mxu0
    %v428 = vadd.f32 %v369, %v427
    %429 = vmatmul.f32.gmra.mxu0 %v349
    %v430 = vpop.f32.mrf.mxu0
    %v431 = vadd.f32 %v369, %v430
    %432 = vmatmul.f32.gmra.mxu0 %v350
    %v433 = vpop.f32.mrf.mxu0
    %v434 = vadd.f32 %v369, %v433
    %435 = vdwg.mxu0
    %v436 = vtanh.pop %v389
    %v437 = vtanh.pop %v392
    %v438 = vtanh.pop %v395
    %v439 = vtanh.pop %v398
    %v440 = vtanh.pop %v401
    %v441 = vtanh.pop %v404
    %v442 = vtanh.pop %v407
    %v443 = vtanh.pop %v410
    %v444 = vtanh.pop %v413
    %v445 = vtanh.pop %v416
    %v446 = vtanh.pop %v419
    %v447 = vtanh.pop %v422
    %v448 = vtanh.pop %v425
    %v449 = vtanh.pop %v428
    %v450 = vtanh.pop %v431
    %v451 = vtanh.pop %v434
    %v452 = vld [vmem:[%s8] sm:$0xff]
    %453 = vmatpush.xpose.msra.mxu0 %v451
    %454 = vmatpush.xpose.msra.mxu0 %v450
    %455 = vmatpush.xpose.msra.mxu0 %v449
    %456 = vmatpush.xpose.msra.mxu0 %v448
    %457 = vmatpush.xpose.msra.mxu0 %v447
    %458 = vmatpush.xpose.msra.mxu0 %v446
    %459 = vmatpush.xpose.msra.mxu0 %v445
    %460 = vmatpush.xpose.msra.mxu0 %v444
    %461 = vmatpush.xpose.msra.mxu0 %v443
    %462 = vmatpush.xpose.msra.mxu0 %v442
    %463 = vmatpush.xpose.msra.mxu0 %v441
    %464 = vmatpush.xpose.msra.mxu0 %v440
    %465 = vmatpush.xpose.msra.mxu0 %v439
    %466 = vmatpush.xpose.msra.mxu0 %v438
    %467 = vmatpush.xpose.msra.mxu0 %v437
    %468 = vmatpush.xpose.msra.mxu0 %v436
    %469 = vmatmul.f32.gmra.mxu0 %v452
    %v470 = vpop.f32.mrf.mxu0
    %v471 = vadd.f32 0.0, %v470
    %472 = vdwg.mxu0
    %v473 = vld [vmem:[%s1] sm:$0x1]
    %s474 = sld [smem:[#allocation2]]
    %v475 = vstv %s474
    %v476 = vmul.f32 %v473, %v475
    %v477 = vadd.f32 %v471, %v476
    %s478 = sld [smem:[#allocation3]]
    %v479 = vstv %s478
    %v480 = vadd.f32 %v477, %v479
    %481 = vst [vmem:[#allocation12] sm:$0x1] %v480
    // Predicated region
    $region62: #{tpu_custom_call.1} parent=1 // pred_check
      _
    $region63: #{tpu_custom_call.1} parent=1 // pred_check_branch
      %483 = sbr.rel (0) target = $region65
    $region64: #{tpu_custom_call.1} parent=1 // pred_region
      %485 = vsyncadd [#allocation6], 0
      %s487 = sshll.u32 [#allocation12], 4
      %s488 = int_to_ptr.vmem [resolvable:$true] %s487
      %s489 = sshll.u32 %s11, 4
      %s490 = int_to_ptr.hbm [resolvable:$true] %s489
      %492 = dma.vmem_to_hbm [thread:$0]  %s488, 16, %s490, [#allocation6]
    $region65: #{tpu_custom_call.1} parent=1 // pred_fallthru
      _
    // Predicated region
    $region66: #{tpu_custom_call.1} parent=1 // pred_check
      _
    $region67: #{tpu_custom_call.1} parent=1 // pred_check_branch
      %494 = sbr.rel (0) target = $region69
    $region68: #{tpu_custom_call.1} parent=1 // pred_region
      %496 = dma.done [#allocation6], 16
    $region69: #{tpu_custom_call.1} parent=1 // pred_fallthru
      _
    %497 = vsyncpa [#allocation5], 1
    %498 = vsyncpa [#allocation8], 1
    %499 = vsyncpa [#allocation11], 1
    %500 = vsyncpa [#allocation6], 1

</llo_original>
